<compile_context>
chip_gen: v5e
topology: v5e:2x2
jax: 0.10.0
libtpu: 0.0.40
codegen_flags: <defaults>
</compile_context>

<pallas_src>
import math

import jax
import jax.numpy as jnp
from jax.experimental import pallas as pl
from jax.experimental.pallas import tpu as pltpu


# ----------------------------------------------------------------------------
# Synthetic task spec (the original module reads a global `tasks` dict).
# ----------------------------------------------------------------------------
TASKS = {
    "sakatis": 1,   # BCEWithLogitsLoss head
    "zhu": 1,       # BCEWithLogitsLoss head
    "xu": 1,        # BCEWithLogitsLoss head
    "mcguffin": 4,  # CrossEntropyLoss head
}

_LANE = 128                      # fused head dim padded to 128 lanes (not 256)
_SUBLANE = 8
_MAX_TM = 4096                   # upper bound on batch-tile rows
_MAX_TK = 2048                   # K-tiling kicks in above this hidden size
_TARGET_STEP_BYTES = 2 << 20     # aim for >= ~2 MiB HBM traffic per grid step
_X_TILE_BUDGET = 8 << 20         # cap on the double-buffered x tile
_VMEM_CAP = 48 << 20             # stay below v7x's 64 MiB physical VMEM
_SMALL_PROBLEM_ELEMS = 1 << 17   # below this, let XLA fuse x @ W + b


# ----------------------------------------------------------------------------
# Pallas kernel: fused multi-head linear   out = x @ W + b   (lane-padded)
# ----------------------------------------------------------------------------
def _multi_head_kernel(x_ref, w_ref, b_ref, o_ref, acc_ref):
    # x_ref: (tm, tk) ; w_ref: (tk, Np) ; b_ref: (1, Np) f32
    # o_ref: (tm, Np) ; acc_ref: (tm, Np) f32 scratch
    k = pl.program_id(1)

    @pl.when(k == 0)
    def _():
        acc_ref[...] = jnp.zeros_like(acc_ref)

    acc_ref[...] += jnp.dot(x_ref[...], w_ref[...],
                            preferred_element_type=jnp.float32)

    @pl.when(k == pl.num_programs(1) - 1)
    def _():
        # Bias is already f32; add in f32, then cast to the output stream dtype.
        o_ref[...] = (acc_ref[...] + b_ref[...]).astype(o_ref.dtype)


def _block_spec(shape, index_map, buffers=None):
    """BlockSpec with optional N-deep buffering (graceful on older jax)."""
    if buffers is not None:
        try:
            return pl.BlockSpec(shape, index_map,
                                pipeline_mode=pl.Buffered(buffers))
        except TypeError:  # pipeline_mode not supported in this jax version
            pass
    return pl.BlockSpec(shape, index_map)


def _choose_tiles(B, H, x_itemsize, out_itemsize):
    # K tile: keep the whole hidden dim unless it is large AND 128-aligned.
    if H > _MAX_TK and H % _LANE == 0:
        tk = _MAX_TK
    else:
        tk = H

    # Batch tile: big enough that each grid step moves >= ~2 MiB of HBM
    # traffic (per-step pipeline overhead ~0.35 us), capped by _MAX_TM and by
    # the double-buffered x-tile VMEM budget.
    bytes_per_row = tk * x_itemsize + _LANE * out_itemsize
    tm = _TARGET_STEP_BYTES // max(bytes_per_row, 1)
    tm = min(tm, _MAX_TM, _X_TILE_BUDGET // max(2 * tk * x_itemsize, 1))

    # v7x megacore: make sure there are >= 2 batch blocks whenever B allows.
    half = -(-B // 2)                       # ceil(B / 2)
    half = -(-half // _SUBLANE) * _SUBLANE  # round up to a sublane multiple
    tm = min(tm, half)

    tm = max(_SUBLANE, (tm // _SUBLANE) * _SUBLANE)
    if tm >= B:
        tm = B  # whole (small) batch in one block (block == full dim is legal)
    return int(tm), int(tk)


def _fused_linear_pallas(x, w, b):
    """x: (B, H); w: (H, Np) lane-padded; b: (1, Np) f32 -> (B, Np) in w.dtype."""
    B, H = x.shape
    Np = w.shape[1]
    out_dtype = w.dtype
    out_itemsize = jnp.dtype(out_dtype).itemsize

    tm, tk = _choose_tiles(B, H, x.dtype.itemsize, out_itemsize)
    n_i = pl.cdiv(B, tm)
    n_k = pl.cdiv(H, tk)

    # Resident weight (single K block) is DMA'd once -> single-buffer it.
    w_buffers = 1 if n_k == 1 else None

    vmem_bytes = (
        2 * tm * tk * x.dtype.itemsize                    # x tile (double-buffered)
        + (1 if n_k == 1 else 2) * tk * Np * w.dtype.itemsize
        + Np * 4                                          # bias (single-buffered)
        + 2 * tm * Np * out_itemsize                      # out tile (double-buffered)
        + tm * Np * 4                                     # f32 accumulator scratch
    )
    vmem_limit = int(min(_VMEM_CAP, max(4 << 20, 2 * vmem_bytes)))

    return pl.pallas_call(
        _multi_head_kernel,
        out_shape=jax.ShapeDtypeStruct((B, Np), out_dtype),
        grid=(n_i, n_k),
        in_specs=[
            _block_spec((tm, tk), lambda i, k: (i, k)),                 # x
            _block_spec((tk, Np), lambda i, k: (k, 0), buffers=w_buffers),  # W
            _block_spec((1, Np), lambda i, k: (0, 0), buffers=1),       # bias
        ],
        out_specs=pl.BlockSpec((tm, Np), lambda i, k: (i, 0)),
        scratch_shapes=[pltpu.VMEM((tm, Np), jnp.float32)],
        compiler_params=pltpu.CompilerParams(
            dimension_semantics=("parallel", "arbitrary"),
            vmem_limit_bytes=vmem_limit,
        ),
    )(x, w, b)


def _fused_linear_xla(x, w, b):
    """Tiny-problem fallback: let XLA fuse the head matmul."""
    acc = jnp.dot(x, w, preferred_element_type=jnp.float32) + b
    return acc.astype(w.dtype)


_fused_linear_pallas_jit = jax.jit(_fused_linear_pallas)
_fused_linear_xla_jit = jax.jit(_fused_linear_xla)


# ----------------------------------------------------------------------------
# MultiOuts: parameter construction + forward
# ----------------------------------------------------------------------------
class MultiOutsPallas:
    def __init__(self, hidden_dim, tasks=TASKS, key=None,
                 param_dtype=jnp.bfloat16,
                 min_pallas_elems=_SMALL_PROBLEM_ELEMS):
        self.hidden_dim = hidden_dim
        self.task_names = list(tasks.keys())
        self.task_dims = [int(t) for t in tasks.values()]
        self.n_out = sum(self.task_dims)
        self.param_dtype = jnp.dtype(param_dtype)
        self.min_pallas_elems = int(min_pallas_elems)
        if key is None:
            key = jax.random.PRNGKey(0)

        # nn.Linear default init: U(-1/sqrt(H), 1/sqrt(H)) for weight and bias.
        bound = 1.0 / math.sqrt(hidden_dim)
        weights, biases = [], []
        for t in self.task_dims:
            key, kw, kb = jax.random.split(key, 3)
            # PyTorch weight is (t, H); store transposed as (H, t) for x @ W.
            weights.append(
                jax.random.uniform(kw, (hidden_dim, t), jnp.float32, -bound, bound))
            biases.append(
                jax.random.uniform(kb, (t,), jnp.float32, -bound, bound))

        # Fuse all heads along the output axis; zero-pad to 128 lanes so stores
        # are lane-dense.  Deliberately NOT padded to 256: the kernel is
        # memory-bound and the padded writeback already dominates traffic.
        w_fused = jnp.concatenate(weights, axis=1)                # (H, sum_t)
        b_fused = jnp.concatenate(biases)[None, :]                # (1, sum_t)
        self.n_pad = max(_LANE, pl.cdiv(self.n_out, _LANE) * _LANE)
        pad = self.n_pad - self.n_out
        self.w_fused = jnp.pad(w_fused, ((0, 0), (0, pad))).astype(self.param_dtype)
        # Bias stays f32: it is added to the f32 MXU accumulator in-kernel.
        self.b_fused = jnp.pad(b_fused, ((0, 0), (0, pad))).astype(jnp.float32)

        # Split points to recover the per-task output list.
        self._splits = []
        off = 0
        for t in self.task_dims[:-1]:
            off += t
            self._splits.append(off)

    def fused_logits_padded(self, x):
        """Lane-dense (B, n_pad) fused logits in param_dtype — preferred output."""
        x = x.astype(self.param_dtype)
        B, H = x.shape
        if B * H < self.min_pallas_elems:
            # Tiny problem: dispatch + pipeline prologue dwarf the work; let
            # XLA fuse it (ideally fuse into the kernel that produces x).
            return _fused_linear_xla_jit(x, self.w_fused, self.b_fused)
        return _fused_linear_pallas_jit(x, self.w_fused, self.b_fused)

    def fused_logits(self, x):
        """(B, sum_t) fused logits; slice only happens here, at point of use."""
        return self.fused_logits_padded(x)[:, : self.n_out]

    def __call__(self, x):
        # nn.Module.forward compatibility: list of per-task logits.  Downstream
        # code should prefer fused_logits_padded(); the width-1 splits below
        # force sub-lane relayouts and tiny HBM round-trips per head.
        fused = self.fused_logits(x)
        return jnp.split(fused, self._splits, axis=1)

    # TODO(synk): single_loss / masked_loss (BCE / CE with -1 masking) are
    # training-time loss utilities, not part of forward(); not implemented.


# ----------------------------------------------------------------------------
# Driver
# ----------------------------------------------------------------------------
if __name__ == "__main__":
    batch, hidden = 8, 32
    key = jax.random.PRNGKey(0)
    kx, kp = jax.random.split(key)

    x = jax.random.normal(kx, (batch, hidden), jnp.float32)

    # min_pallas_elems=0 forces the Pallas path even at this tiny demo shape
    # (the default dispatch would hand it to XLA, per the size threshold).
    model = MultiOutsPallas(hidden_dim=hidden, tasks=TASKS, key=kp,
                            min_pallas_elems=0)

    fused_padded = jax.block_until_ready(model.fused_logits_padded(x))  # Pallas
    outs = [jax.block_until_ready(o) for o in model(x)]

    # Pure-JAX reference with the same dtype pipeline (bf16 x/W, f32 acc+bias).
    xb = x.astype(model.param_dtype)
    ref_padded = (jnp.dot(xb, model.w_fused, preferred_element_type=jnp.float32)
                  + model.b_fused).astype(model.param_dtype)

    ok = fused_padded.shape == (batch, model.n_pad)
    ok &= bool(jnp.allclose(fused_padded.astype(jnp.float32),
                            ref_padded.astype(jnp.float32),
                            atol=1e-2, rtol=1e-2))
    off = 0
    for o, t in zip(outs, model.task_dims):
        ref_t = ref_padded[:, off:off + t].astype(jnp.float32)
        ok &= (o.shape == (batch, t))
        ok &= bool(jnp.allclose(o.astype(jnp.float32), ref_t,
                                atol=1e-2, rtol=1e-2))
        off += t

    if ok:
        print("KERNEL_OK")
    else:
        print("MISMATCH")
</pallas_src>

<mosaic_0001>
module attributes {stable_mosaic.version = 11 : i64} {
  func.func @_multi_head_kernel(%arg0: i32, %arg1: i32, %arg2: memref<8x32xbf16, #tpu.memory_space<vmem>>, %arg3: memref<32x128xbf16, #tpu.memory_space<vmem>>, %arg4: memref<1x128xf32, #tpu.memory_space<vmem>>, %arg5: memref<8x128xbf16, #tpu.memory_space<vmem>>, %arg6: memref<8x128xf32, #tpu.memory_space<vmem>>) attributes {dimension_semantics = [#tpu.dimension_semantics<parallel>, #tpu.dimension_semantics<arbitrary>], iteration_bounds = array<i64: 1, 1>, scalar_prefetch = 0 : i64, scratch_operands = 1 : i64, tpu.core_type = #tpu.core_type<tc>, window_params = [{transform_indices = @transform_0, window_bounds = array<i64: 8, 32>}, {pipeline_mode = #tpu.pipeline_mode<synchronous>, transform_indices = @transform_1, window_bounds = array<i64: 32, 128>}, {pipeline_mode = #tpu.pipeline_mode<synchronous>, transform_indices = @transform_2, window_bounds = array<i64: 1, 128>}, {transform_indices = @transform_3, window_bounds = array<i64: 8, 128>}]} {
    %c0_i32 = arith.constant 0 : i32
    %0 = arith.cmpi eq, %arg1, %c0_i32 : i32
    %1 = arith.extui %0 : i1 to i32
    %c0_i32_0 = arith.constant 0 : i32
    %2 = arith.cmpi ne, %1, %c0_i32_0 : i32
    scf.if %2 {
      %cst_10 = arith.constant 0.000000e+00 : f32
      %12 = vector.broadcast %cst_10 : f32 to vector<8x128xf32>
      %c0_11 = arith.constant 0 : index
      %c0_12 = arith.constant 0 : index
      %13 = vector.load %arg6[%c0_11, %c0_12] : memref<8x128xf32, #tpu.memory_space<vmem>>, vector<8x128xf32>
      tpu.vector_store %arg6[%c0_11, %c0_12], %12 {strides = array<i32>} : memref<8x128xf32, #tpu.memory_space<vmem>>, vector<8x128xf32>,
    } else {
    }
    %c0 = arith.constant 0 : index
    %c0_1 = arith.constant 0 : index
    %3 = vector.load %arg6[%c0, %c0_1] : memref<8x128xf32, #tpu.memory_space<vmem>>, vector<8x128xf32>
    %c0_2 = arith.constant 0 : index
    %c0_3 = arith.constant 0 : index
    %4 = vector.load %arg2[%c0_2, %c0_3] : memref<8x32xbf16, #tpu.memory_space<vmem>>, vector<8x32xbf16>
    %c0_4 = arith.constant 0 : index
    %c0_5 = arith.constant 0 : index
    %5 = vector.load %arg3[%c0_4, %c0_5] : memref<32x128xbf16, #tpu.memory_space<vmem>>, vector<32x128xbf16>
    %cst = arith.constant dense<0.000000e+00> : vector<8x128xf32>
    %6 = tpu.matmul %4, %5, %cst {dimension_numbers = #tpu.dot_dimension_numbers<[1], [0], [0], [1], [0, 0, 1, 1], [], []>} : vector<8x32xbf16>, vector<32x128xbf16>, vector<8x128xf32> -> vector<8x128xf32>
    %7 = arith.addf %3, %6 : vector<8x128xf32>
    %c0_6 = arith.constant 0 : index
    %c0_7 = arith.constant 0 : index
    %8 = vector.load %arg6[%c0_6, %c0_7] : memref<8x128xf32, #tpu.memory_space<vmem>>, vector<8x128xf32>
    tpu.vector_store %arg6[%c0_6, %c0_7], %7 {strides = array<i32>} : memref<8x128xf32, #tpu.memory_space<vmem>>, vector<8x128xf32>,
    %c0_i32_8 = arith.constant 0 : i32
    %9 = arith.cmpi eq, %arg1, %c0_i32_8 : i32
    %10 = arith.extui %9 : i1 to i32
    %c0_i32_9 = arith.constant 0 : i32
    %11 = arith.cmpi ne, %10, %c0_i32_9 : i32
    scf.if %11 {
      %c0_10 = arith.constant 0 : index
      %c0_11 = arith.constant 0 : index
      %12 = vector.load %arg6[%c0_10, %c0_11] : memref<8x128xf32, #tpu.memory_space<vmem>>, vector<8x128xf32>
      %c0_12 = arith.constant 0 : index
      %c0_13 = arith.constant 0 : index
      %13 = vector.load %arg4[%c0_12, %c0_13] : memref<1x128xf32, #tpu.memory_space<vmem>>, vector<1x128xf32>
      %14 = vector.broadcast %13 : vector<1x128xf32> to vector<8x128xf32>
      %15 = arith.addf %12, %14 : vector<8x128xf32>
      %16 = arith.truncf %15 : vector<8x128xf32> to vector<8x128xbf16>
      %c0_14 = arith.constant 0 : index
      %c0_15 = arith.constant 0 : index
      %17 = vector.load %arg5[%c0_14, %c0_15] : memref<8x128xbf16, #tpu.memory_space<vmem>>, vector<8x128xbf16>
      tpu.vector_store %arg5[%c0_14, %c0_15], %16 {strides = array<i32>} : memref<8x128xbf16, #tpu.memory_space<vmem>>, vector<8x128xbf16>,
    } else {
    }
    return
  }
  func.func @transform_0(%arg0: i32, %arg1: i32) -> (i32, i32) {
    %c0_i32 = arith.constant 0 : i32
    return %arg0, %arg1 : i32, i32
  }
  func.func @transform_1(%arg0: i32, %arg1: i32) -> (i32, i32) {
    %c0_i32 = arith.constant 0 : i32
    %c0_i32_0 = arith.constant 0 : i32
    return %arg1, %c0_i32 : i32, i32
  }
  func.func @transform_2(%arg0: i32, %arg1: i32) -> (i32, i32) {
    %c0_i32 = arith.constant 0 : i32
    %c0_i32_0 = arith.constant 0 : i32
    %c0_i32_1 = arith.constant 0 : i32
    return %c0_i32, %c0_i32_0 : i32, i32
  }
  func.func @transform_3(%arg0: i32, %arg1: i32) -> (i32, i32) {
    %c0_i32 = arith.constant 0 : i32
    %c0_i32_0 = arith.constant 0 : i32
    return %arg0, %c0_i32 : i32, i32
  }
}

</mosaic_0001>

<llo_original>
// kernel: _fused_linear_pallas.1
$region0: #{_fused_linear_pallas.1}
  #allocation0 [shape = 'u32[]', space=smem, size = 0x4, offset = 0x4, fixed_abs, tag = 'smem constant byte address 0x4 - core index']
  #allocation1 [shape = 'u32[72,128]{1,0:T(1,128)}', space=vmem, size = 0x9000, scoped, tag = 'internal scratch']
  #allocation2 [shape = 'f32[8,128]{1,0:T(8,128)}', space=vmem, size = 0x1000, scoped, tag = 'scratch operand']
  %s0 = inlined_call_operand.hbm [shape: bf16[8,32], index: 0, kind: input, shape index: {}]
  %s1 = inlined_call_operand.hbm [shape: bf16[32,128], index: 1, kind: input, shape index: {}]
  %s2 = inlined_call_operand.vmem [shape: f32[1,128], index: 2, kind: input, shape index: {}]
  %s3 = inlined_call_operand.hbm [shape: bf16[8,128], index: 3, kind: output, shape index: {}]
  %s4 = sld [smem:[#allocation0]]
  $region38: #{_fused_linear_pallas.1} parent=0
    _
  %s6 = ssub.s32 1, %s4
  %s7 = scalar_select 0, %s6, %s4
  $region1: #{_fused_linear_pallas.1} parent=0
    #allocation3 [shape = 'u8[2048]{0}', space=vmem, size = 0x800, scoped, tag = 'input window, operand 0, single buffered']
    #allocation4 [shape = 's32[1]{0}', space=sflag, size = 0x4, scoped, tag = 'scoped memory for _fused_linear_pallas.1']
    #allocation5 [shape = 's32[1]{0}', space=sflag, size = 0x4, scoped, tag = 'scoped memory for _fused_linear_pallas.1']
    #allocation6 [shape = 'u8[8192]{0}', space=vmem, size = 0x2000, scoped, tag = 'input window, operand 1, single buffered']
    #allocation7 [shape = 's32[1]{0}', space=sflag, size = 0x4, scoped, tag = 'scoped memory for _fused_linear_pallas.1']
    #allocation8 [shape = 'u8[2048]{0}', space=vmem, size = 0x800, scoped, tag = 'output window, operand 0, single buffered']
    %8 = vsyncpa [#allocation4], 0
    %9 = vsyncpa [#allocation7], 0
    %10 = vsyncpa [#allocation5], 0
    // Predicated region
    $region2: #{_fused_linear_pallas.1} parent=1 // pred_check
      _
    $region3: #{_fused_linear_pallas.1} parent=1 // pred_check_branch
      %12 = sbr.rel (0) target = $region5
    $region4: #{_fused_linear_pallas.1} parent=1 // pred_region
      %14 = vsyncadd [#allocation4], 0
      %s16 = sshll.u32 %s0, 4
      %s17 = int_to_ptr.hbm [resolvable:$true] %s16
      %s18 = sshll.u32 [#allocation3], 4
      %s19 = int_to_ptr.vmem [resolvable:$true] %s18
      %21 = dma.hbm_to_vmem [thread:$0]  %s17, 64, %s19, [#allocation4]
    $region5: #{_fused_linear_pallas.1} parent=1 // pred_fallthru
      _
    // Predicated region
    $region6: #{_fused_linear_pallas.1} parent=1 // pred_check
      _
    $region7: #{_fused_linear_pallas.1} parent=1 // pred_check_branch
      %23 = sbr.rel (0) target = $region9
    $region8: #{_fused_linear_pallas.1} parent=1 // pred_region
      %25 = vsyncadd [#allocation7], 0
      %s26 = sshll.u32 %s1, 4
      %s27 = int_to_ptr.hbm [resolvable:$true] %s26
      %s28 = sshll.u32 [#allocation6], 4
      %s29 = int_to_ptr.vmem [resolvable:$true] %s28
      %34 = dma.hbm_to_vmem [thread:$0]  %s27, 256, %s29, [#allocation7], 64, 64, 4
    $region9: #{_fused_linear_pallas.1} parent=1 // pred_fallthru
      _
    // Predicated region
    $region10: #{_fused_linear_pallas.1} parent=1 // pred_check
      _
    $region11: #{_fused_linear_pallas.1} parent=1 // pred_check_branch
      %36 = sbr.rel (0) target = $region13
    $region12: #{_fused_linear_pallas.1} parent=1 // pred_region
      _
    $region13: #{_fused_linear_pallas.1} parent=1 // pred_fallthru
      _
    // Predicated region
    $region14: #{_fused_linear_pallas.1} parent=1 // pred_check
      _
    $region15: #{_fused_linear_pallas.1} parent=1 // pred_check_branch
      %38 = sbr.rel (0) target = $region17
    $region16: #{_fused_linear_pallas.1} parent=1 // pred_region
      %40 = dma.done [#allocation4], 64
    $region17: #{_fused_linear_pallas.1} parent=1 // pred_fallthru
      _
    // Predicated region
    $region18: #{_fused_linear_pallas.1} parent=1 // pred_check
      _
    $region19: #{_fused_linear_pallas.1} parent=1 // pred_check_branch
      %42 = sbr.rel (0) target = $region21
    $region20: #{_fused_linear_pallas.1} parent=1 // pred_region
      %44 = dma.done [#allocation7], 256
    $region21: #{_fused_linear_pallas.1} parent=1 // pred_fallthru
      _
    %p46 = scmp.eq.s32.totalorder 0, 0
    // Predicated region
    $region22: #{_fused_linear_pallas.1} parent=1 // pred_check
      %p47 = pneg %p46
    $region23: #{_fused_linear_pallas.1} parent=1 // pred_check_branch
      %49 = sbr.rel (%p47) target = $region25
    $region24: #{_fused_linear_pallas.1} parent=1 // pred_region
      %50 = vst [vmem:[#allocation2] sm:$0xff] 0.0
    $region25: #{_fused_linear_pallas.1} parent=1 // pred_fallthru
      _
    %v51 = vld [vmem:[#allocation2] sm:$0xff]
    %v52 = vld [vmem:[#allocation3] sm:$0xf]
    %v53 = vld [vmem:[#allocation6] sm:$0xf]
    %v54 = vld [vmem:[#allocation6 + $0x4] sm:$0xf]
    %v55 = vld [vmem:[#allocation6 + $0x8] sm:$0xf]
    %v56 = vld [vmem:[#allocation6 + $0xc] sm:$0xf]
    %v61 = vunpack.c.l.b16 %v53
    %v62 = vunpack.c.l.b16 %v54
    %v63 = vunpack.c.l.b16 %v55
    %v64 = vunpack.c.l.b16 %v56
    %v65 = vpack.c.b16 %v62, %v61
    %v66 = vpack.c.b16 %v64, %v63
    %vm69 = vcmask 261120
    %v71 = vsel %vm69, %v52, 0
    %73 = vmatpush.bf16.msra.mxu0 0
    %74 = vmatpush.bf16.msra.mxu0 0
    %75 = vmatpush.bf16.msra.mxu0 0
    %76 = vmatpush.bf16.msra.mxu0 0
    %77 = vmatpush.bf16.msra.mxu0 0
    %78 = vmatpush.bf16.msra.mxu0 0
    %79 = vmatpush.bf16.msra.mxu0 %v66
    %80 = vmatpush.bf16.msra.mxu0 %v65
    %81 = vmatmul.bf16.gmra.mxu0 %v71
    %v82 = vpop.f32.mrf.mxu0
    %v83 = vadd.f32 0.0, %v82
    %v84 = vpop.f32.mrf.mxu0
    %85 = vdwg.mxu0
    %v86 = vadd.f32 %v51, %v83
    %87 = vst [vmem:[#allocation2] sm:$0xff] %v86
    // Predicated region
    $region26: #{_fused_linear_pallas.1} parent=1 // pred_check
      %p88 = pneg %p46
    $region27: #{_fused_linear_pallas.1} parent=1 // pred_check_branch
      %90 = sbr.rel (%p88) target = $region29
    $region28: #{_fused_linear_pallas.1} parent=1 // pred_region
      %v91 = vld [vmem:[#allocation2] sm:$0xff]
      %v92 = vld [vmem:[%s2] sm:$0x1]
      %v94 = vperm.slane %v92, 0
      %v96 = vadd.f32 %v91, %v94
      %v97 = vpack.c.bf16 %v96, %v96
      %98 = vst [vmem:[#allocation8] sm:$0xf] %v97
    $region29: #{_fused_linear_pallas.1} parent=1 // pred_fallthru
      _
    // Predicated region
    $region30: #{_fused_linear_pallas.1} parent=1 // pred_check
      _
    $region31: #{_fused_linear_pallas.1} parent=1 // pred_check_branch
      %100 = sbr.rel (0) target = $region33
    $region32: #{_fused_linear_pallas.1} parent=1 // pred_region
      %102 = vsyncadd [#allocation5], 0
      %s104 = sshll.u32 [#allocation8], 4
      %s105 = int_to_ptr.vmem [resolvable:$true] %s104
      %s106 = sshll.u32 %s3, 4
      %s107 = int_to_ptr.hbm [resolvable:$true] %s106
      %109 = dma.vmem_to_hbm [thread:$0]  %s105, 64, %s107, [#allocation5]
    $region33: #{_fused_linear_pallas.1} parent=1 // pred_fallthru
      _
    // Predicated region
    $region34: #{_fused_linear_pallas.1} parent=1 // pred_check
      _
    $region35: #{_fused_linear_pallas.1} parent=1 // pred_check_branch
      %111 = sbr.rel (0) target = $region37
    $region36: #{_fused_linear_pallas.1} parent=1 // pred_region
      %113 = dma.done [#allocation5], 64
    $region37: #{_fused_linear_pallas.1} parent=1 // pred_fallthru
      _
    %114 = vsyncpa [#allocation4], 1
    %115 = vsyncpa [#allocation7], 1
    %116 = vsyncpa [#allocation5], 1

</llo_original>
